<compile_context>
chip_gen: v5e
topology: v5e:2x2
jax: 0.10.0
libtpu: 0.0.40
codegen_flags: <defaults>
</compile_context>

<pallas_src>
import math
from functools import partial

import jax
import jax.numpy as jnp
from jax.experimental import pallas as pl
from jax.experimental.pallas import tpu as pltpu


# Per-DMA chunk size.  No VMEM is used (HBM->HBM copy), so this is only about
# amortizing per-DMA setup cost; 8 MiB is comfortable on v5e/v6e/v7x alike.
_TARGET_CHUNK_BYTES = 8 * 1024 * 1024


def _pick_layout(total):
    """Lane-dense (rows, width) slab if total is a multiple of 128, else None.

    Prefers the widest width that still leaves >= 8 rows so chunking over the
    leading dim has something to chunk; falls back to the widest divisor.
    """
    best = None
    for w in (4096, 2048, 1024, 512, 256, 128):
        if total % w == 0:
            if best is None:
                best = w
            if total // w >= 8:
                return total // w, w
    if best is not None:
        return total // best, best
    return None  # caller uses the flat 1-D fallback


def _make_hbm_copy_kernel(n_rows, chunk_rows):
    """Kernel: chunked HBM->HBM identity copy with <= 2 outstanding DMAs.

    Works for both 2-D (rows, width) and 1-D (total,) slabs: slices are taken
    along the leading dim only, so the trailing dims (if any) ride along.
    """
    n_full = n_rows // chunk_rows
    rem = n_rows - n_full * chunk_rows

    def kernel(x_hbm, o_hbm, sem):
        def chunk_copy(start, size, slot):
            return pltpu.make_async_copy(
                x_hbm.at[pl.ds(start, size)],
                o_hbm.at[pl.ds(start, size)],
                sem.at[slot],
            )

        if n_full > 0:
            @pl.loop(0, n_full)
            def _(i):
                slot = i % 2

                # Free this semaphore slot before reusing it; keeps exactly
                # two DMAs in flight (current + previous).
                @pl.when(i >= 2)
                def _():
                    chunk_copy(0, chunk_rows, slot).wait()

                chunk_copy(i * chunk_rows, chunk_rows, slot).start()

            # Drain the (up to two) still-outstanding full-chunk DMAs.
            for k in range(min(n_full, 2)):
                i = n_full - 1 - k
                chunk_copy(0, chunk_rows, i % 2).wait()

        if rem > 0:
            tail = chunk_copy(n_full * chunk_rows, rem, 0)
            tail.start()
            tail.wait()

    return kernel


@partial(jax.jit, static_argnums=(1, 2))
def _batch_reshape_pallas(x, shape, chunk_bytes=_TARGET_CHUNK_BYTES):
    b = x.shape[0]
    n = math.prod(x.shape[1:])
    tgt_n = math.prod(shape)
    assert n == tgt_n, f"cannot reshape {x.shape[1:]} -> {shape}"

    total = b * n
    itemsize = jnp.dtype(x.dtype).itemsize

    layout = _pick_layout(total)
    if layout is not None:
        rows, width = layout
        slab_shape = (rows, width)
        row_bytes = width * itemsize
        align = 8            # keep DMA windows sublane-tile aligned
    else:
        # Payload not a multiple of 128 elements: copy it as a flat 1-D slab.
        rows = total
        slab_shape = (total,)
        row_bytes = itemsize
        align = 1024         # 8*128 elements keeps chunk boundaries tile aligned

    # Metadata-only flatten (glue); the kernel below is the data movement.
    x_slab = x.reshape(slab_shape)

    chunk_rows = max(1, min(rows, chunk_bytes // row_bytes))
    if chunk_rows >= align:
        chunk_rows -= chunk_rows % align

    y_slab = pl.pallas_call(
        _make_hbm_copy_kernel(rows, chunk_rows),
        out_shape=jax.ShapeDtypeStruct(slab_shape, x.dtype),
        in_specs=[pl.BlockSpec(memory_space=pl.ANY)],   # raw HBM ref, no auto-DMA
        out_specs=pl.BlockSpec(memory_space=pl.ANY),    # written directly via DMA
        scratch_shapes=[pltpu.SemaphoreType.DMA((2,))],
        cost_estimate=pl.CostEstimate(
            flops=0,
            transcendentals=0,
            bytes_accessed=2 * total * itemsize,
        ),
    )(x_slab)

    # Final reshape to (B,) + shape: metadata-only (glue).
    return y_slab.reshape((b,) + tuple(shape))


def batch_reshape(x, *shape, use_pallas_copy=True):
    """Equivalent of BatchReshape(*shape)(x): reshape keeping the batch dim.

    use_pallas_copy=False returns the metadata-only reshape (0 bytes of HBM
    traffic) — the truly optimal path.  Default True so the Pallas
    data-movement kernel is exercised.
    """
    if not use_pallas_copy:
        return x.reshape((x.shape[0],) + tuple(shape))
    return _batch_reshape_pallas(x, tuple(shape))


if __name__ == "__main__":
    key = jax.random.PRNGKey(0)
    k0, k1 = jax.random.split(key)

    # Input consistent with an NCHW feature map: (B=2, C=4, H=16, W=16)
    x = jax.random.normal(k0, (2, 4, 16, 16), dtype=jnp.float32)
    target_shape = (16, 64)
    y_ref = x.reshape((x.shape[0],) + target_shape)

    # 1) Default path: lane-dense 2-D slab, single 2-outstanding-free DMA chunk.
    y = jax.block_until_ready(batch_reshape(x, *target_shape))
    assert y.shape == (2, 16, 64), y.shape
    assert y.dtype == x.dtype
    assert bool(jnp.array_equal(y, y_ref))

    # 2) Force tiny chunks to exercise the pipelined multi-chunk + tail path
    #    on the 2-D slab (n_full=2, remainder=2 rows).
    y2 = jax.block_until_ready(_batch_reshape_pallas(x, target_shape, 3 * 1024))
    assert bool(jnp.array_equal(y2, y_ref))

    # 3) Non-multiple-of-128 payload: (2, 3, 5, 7) -> (2, 105) uses the flat
    #    1-D fallback; tiny chunks exercise in-loop waits + drain + tail.
    x_odd = jax.random.normal(k1, (2, 3, 5, 7), dtype=jnp.float32)
    y3 = jax.block_until_ready(_batch_reshape_pallas(x_odd, (105,), 256))
    y3_ref = x_odd.reshape((2, 105))
    assert y3.shape == (2, 105), y3.shape
    assert bool(jnp.array_equal(y3, y3_ref))

    print("KERNEL_OK")
</pallas_src>

<mosaic_0001>
module attributes {stable_mosaic.version = 11 : i64} {
  func.func @kernel(%arg0: memref<8x256xf32, #tpu.memory_space<any>>, %arg1: memref<8x256xf32, #tpu.memory_space<any>>, %arg2: memref<2x!tpu.dma_semaphore, #tpu.memory_space<semaphore_mem>>) attributes {dimension_semantics = [], scalar_prefetch = 0 : i64, scratch_operands = 1 : i64, tpu.core_type = #tpu.core_type<tc>} {
    %c0_i32 = arith.constant 0 : i32
    %c1_i32 = arith.constant 1 : i32
    %0 = arith.muli %c0_i32, %c1_i32 : i32
    %c0_i32_0 = arith.constant 0 : i32
    %1 = arith.addi %c0_i32_0, %0 : i32
    %c2_i32 = arith.constant 2 : i32
    %c0_i32_1 = arith.constant 0 : i32
    %2 = arith.cmpi eq, %c2_i32, %c0_i32_1 : i32
    %c1_i32_2 = arith.constant 1 : i32
    %3 = arith.select %2, %c1_i32_2, %c2_i32 : i32
    %4 = arith.remsi %1, %3 : i32
    %c0_i32_3 = arith.constant 0 : i32
    %5 = arith.cmpi ne, %4, %c0_i32_3 : i32
    %c0_i32_4 = arith.constant 0 : i32
    %6 = arith.cmpi slt, %4, %c0_i32_4 : i32
    %c0_i32_5 = arith.constant 0 : i32
    %7 = arith.cmpi slt, %3, %c0_i32_5 : i32
    %8 = arith.xori %6, %7 : i1
    %9 = arith.andi %8, %5 : i1
    %10 = arith.addi %4, %3 : i32
    %11 = arith.select %9, %10, %4 : i32
    %c2_i32_6 = arith.constant 2 : i32
    %12 = arith.cmpi sge, %1, %c2_i32_6 : i32
    %13 = arith.extui %12 : i1 to i32
    %c0_i32_7 = arith.constant 0 : i32
    %14 = arith.cmpi ne, %13, %c0_i32_7 : i32
    scf.if %14 {
      %c0_i32_16 = arith.constant 0 : i32
      %c0_i32_17 = arith.constant 0 : i32
      %24 = tpu.memref_slice %arg0[%c0_i32_16, %c0_i32_17] : memref<8x256xf32, #tpu.memory_space<any>> -> memref<8x256xf32, #tpu.memory_space<any>>
      %c0_i32_18 = arith.constant 0 : i32
      %c0_i32_19 = arith.constant 0 : i32
      %25 = tpu.memref_slice %arg1[%c0_i32_18, %c0_i32_19] : memref<8x256xf32, #tpu.memory_space<any>> -> memref<8x256xf32, #tpu.memory_space<any>>
      %26 = tpu.memref_slice %arg2[%11] : memref<2x!tpu.dma_semaphore, #tpu.memory_space<semaphore_mem>> -> memref<1x!tpu.dma_semaphore, #tpu.memory_space<semaphore_mem>>
      %27 = tpu.memref_squeeze %26 : memref<1x!tpu.dma_semaphore, #tpu.memory_space<semaphore_mem>> -> memref<!tpu.dma_semaphore, #tpu.memory_space<semaphore_mem>>
      tpu.wait_dma2 semaphore(%27 : memref<!tpu.dma_semaphore, #tpu.memory_space<semaphore_mem>>) src(%24 : memref<8x256xf32, #tpu.memory_space<any>>) dst(%25 : memref<8x256xf32, #tpu.memory_space<any>>)
    } else {
    }
    %c8_i32 = arith.constant 8 : i32
    %15 = arith.muli %1, %c8_i32 : i32
    %c0_i32_8 = arith.constant 0 : i32
    %16 = tpu.memref_slice %arg0[%15, %c0_i32_8] : memref<8x256xf32, #tpu.memory_space<any>> -> memref<8x256xf32, #tpu.memory_space<any>>
    %c0_i32_9 = arith.constant 0 : i32
    %17 = tpu.memref_slice %arg1[%15, %c0_i32_9] : memref<8x256xf32, #tpu.memory_space<any>> -> memref<8x256xf32, #tpu.memory_space<any>>
    %18 = tpu.memref_slice %arg2[%11] : memref<2x!tpu.dma_semaphore, #tpu.memory_space<semaphore_mem>> -> memref<1x!tpu.dma_semaphore, #tpu.memory_space<semaphore_mem>>
    %19 = tpu.memref_squeeze %18 : memref<1x!tpu.dma_semaphore, #tpu.memory_space<semaphore_mem>> -> memref<!tpu.dma_semaphore, #tpu.memory_space<semaphore_mem>>
    tpu.enqueue_dma source(%16 : memref<8x256xf32, #tpu.memory_space<any>>) target(%17 : memref<8x256xf32, #tpu.memory_space<any>>) target_semaphore(%19 : memref<!tpu.dma_semaphore, #tpu.memory_space<semaphore_mem>>)
    %c1_i32_10 = arith.constant 1 : i32
    %c0_i32_11 = arith.constant 0 : i32
    %c0_i32_12 = arith.constant 0 : i32
    %c0_i32_13 = arith.constant 0 : i32
    %20 = tpu.memref_slice %arg0[%c0_i32_12, %c0_i32_13] : memref<8x256xf32, #tpu.memory_space<any>> -> memref<8x256xf32, #tpu.memory_space<any>>
    %c0_i32_14 = arith.constant 0 : i32
    %c0_i32_15 = arith.constant 0 : i32
    %21 = tpu.memref_slice %arg1[%c0_i32_14, %c0_i32_15] : memref<8x256xf32, #tpu.memory_space<any>> -> memref<8x256xf32, #tpu.memory_space<any>>
    %22 = tpu.memref_slice %arg2[%c0_i32_11] : memref<2x!tpu.dma_semaphore, #tpu.memory_space<semaphore_mem>> -> memref<1x!tpu.dma_semaphore, #tpu.memory_space<semaphore_mem>>
    %23 = tpu.memref_squeeze %22 : memref<1x!tpu.dma_semaphore, #tpu.memory_space<semaphore_mem>> -> memref<!tpu.dma_semaphore, #tpu.memory_space<semaphore_mem>>
    tpu.wait_dma2 semaphore(%23 : memref<!tpu.dma_semaphore, #tpu.memory_space<semaphore_mem>>) src(%20 : memref<8x256xf32, #tpu.memory_space<any>>) dst(%21 : memref<8x256xf32, #tpu.memory_space<any>>)
    return
  }
}

</mosaic_0001>

<llo_original>
// kernel: _batch_reshape_pallas.1
$region0: #{_batch_reshape_pallas.1}
  #allocation0 [shape = 'u32[]', space=smem, size = 0x4, offset = 0x4, fixed_abs, tag = 'smem constant byte address 0x4 - core index']
  #allocation1 [shape = 'u32[72,128]{1,0:T(1,128)}', space=vmem, size = 0x9000, scoped, tag = 'internal scratch']
  #allocation2 [shape = 's32[2]{0}', space=sflag, size = 0x8, scoped, tag = 'scratch operand']
  #allocation3 [shape = 's32[]', space=sflag, size = 0x4, offset = 0, fixed_abs, tag = 'sflag constant byte address 0x0 - dummy sync flag']
  %s0 = inlined_call_operand.vmem [shape: f32[8,256], index: 0, kind: input, shape index: {}]
  %s1 = inlined_call_operand.vmem [shape: f32[8,256], index: 1, kind: output, shape index: {}]
  %s2 = sld [smem:[#allocation0]]
  $region21: #{_batch_reshape_pallas.1} parent=0
    _
  %s4 = ssub.s32 1, %s2
  %s5 = scalar_select 0, %s4, %s2
  // Predicated region
  $region2: #{_batch_reshape_pallas.1} parent=0 // pred_check
    _
  $region3: #{_batch_reshape_pallas.1} parent=0 // pred_check_branch
    %7 = sbr.rel (0) target = $region5
  $region4: #{_batch_reshape_pallas.1} parent=0 // pred_region
    loop: start=0, step=1, limit=1
    $region6: #{_batch_reshape_pallas.1} parent=4 // loop_pre_header
      _
    $region7: #{_batch_reshape_pallas.1} parent=4 // loop_header
      %s9 = sphi 0, %s13
      %p10 = scmp.ge.s32.totalorder %s9, 1
      %s14 = sphi %s0, %s0
      %s15 = sphi %s1, %s1
    $region8: #{_batch_reshape_pallas.1} parent=4 // loop_header_branch
      %12 = sbr.rel (%p10) target = $region12
    $region9: #{_batch_reshape_pallas.1} parent=4 // loop_body
      %v16 = vld [vmem:[%s14] sm:$0xff]
      %17 = vst [vmem:[%s15] sm:$0xff] %v16
      %v18 = vld [vmem:[%s14 + $0x8] sm:$0xff]
      %19 = vst [vmem:[%s15 + $0x8] sm:$0xff] %v18
    $region10: #{_batch_reshape_pallas.1} parent=4 // loop_footer
      %s13 = sadd.s32 1, %s9
    $region11: #{_batch_reshape_pallas.1} parent=4 // loop_footer_branch
      %8 = sbr.rel target = $region7
    $region12: #{_batch_reshape_pallas.1} parent=4 // loop_exit
      _
  $region5: #{_batch_reshape_pallas.1} parent=0 // pred_fallthru
    _
  // Predicated region
  $region13: #{_batch_reshape_pallas.1} parent=0 // pred_check
    _
  $region14: #{_batch_reshape_pallas.1} parent=0 // pred_check_branch
    %21 = sbr.rel target = $region16
  $region15: #{_batch_reshape_pallas.1} parent=0 // pred_region
    _
  $region16: #{_batch_reshape_pallas.1} parent=0 // pred_fallthru
    _
  // Predicated region
  $region17: #{_batch_reshape_pallas.1} parent=0 // pred_check
    _
  $region18: #{_batch_reshape_pallas.1} parent=0 // pred_check_branch
    %24 = sbr.rel (0) target = $region20
  $region19: #{_batch_reshape_pallas.1} parent=0 // pred_region
    %25 = vsyncadd [#allocation2], 256
  $region20: #{_batch_reshape_pallas.1} parent=0 // pred_fallthru
    _
  %s26 = smul.u32 8, 1
  %s27 = smul.u32 %s26, 2
  %s28 = sshll.u32 %s27, 4
  %29 = dma.done [#allocation2], %s28
  %30 = vsyncmov [#allocation2]
  %s31 = vpop.sfrf %30
  %p32 = scmp.eq.s32.totalorder %s31, 0
  %p33 = pneg %p32
  %35 = shalt.err (%p33)
  %s36 = scalar_lea.sflag [#allocation2], 1
  %37 = vsyncmov %s36
  %s38 = vpop.sfrf %37
  %p39 = scmp.eq.s32.totalorder %s38, 0
  %p40 = pneg %p39
  %42 = shalt.err (%p40)

</llo_original>
